<compile_context>
chip_gen: v7x
topology: tpu7x:2x2x1
jax: 0.10.0
libtpu: 0.0.40
codegen_flags: <defaults>
</compile_context>

<pallas_src>
import functools

import numpy as np
import jax
import jax.numpy as jnp
from jax import lax
from jax.experimental import pallas as pl
from jax.experimental.pallas import tpu as pltpu


def _conv_accumulate(x_ref, b_ref, acc_ref, *, bimg, ho, stride):
    """acc[img*ho + r, :] = sum_kh x_ref[img, r*stride + kh, :] @ b_ref[kh]."""
    k = x_ref.shape[-1]
    for kh in range(3):                      # unrolled: 3 bf16 MXU matmuls, f32 acc
        if stride == 1:
            xk = x_ref[:, pl.ds(kh, ho), :]
        else:
            # TODO(synk): for stride 2, de-interleave even/odd rows in the wrapper
            # instead of this strided sublane read.
            xk = x_ref[:, pl.ds(kh, ho, stride), :]
        xk = xk.reshape(bimg * ho, k)        # (Bimg*Ho, W*Cin) lane-dense LHS
        part = jnp.dot(xk, b_ref[kh], preferred_element_type=jnp.float32)
        if kh == 0:
            acc_ref[...] = part
        else:
            acc_ref[...] += part


def _stats_kernel(x_ref, b_ref, stats_ref, acc_ref, *, bimg, ho, stride):
    """Pass 1: conv for one block of images -> per-block [sum(y); sum(y*y)]."""
    _conv_accumulate(x_ref, b_ref, acc_ref, bimg=bimg, ho=ho, stride=stride)
    acc = acc_ref[...]
    stats_ref[0] = jnp.concatenate(
        [jnp.sum(acc, axis=0, keepdims=True),
         jnp.sum(acc * acc, axis=0, keepdims=True)], axis=0)


def _conv_bn_relu_kernel(x_ref, b_ref, scale_ref, shift_ref, o_ref, acc_ref, *,
                         bimg, ho, stride):
    """Pass 2: recompute conv, apply per-channel scale/shift + ReLU, single store."""
    _conv_accumulate(x_ref, b_ref, acc_ref, bimg=bimg, ho=ho, stride=stride)
    o_ref[...] = jnp.maximum(
        acc_ref[...] * scale_ref[...] + shift_ref[...], 0.0).astype(o_ref.dtype)


def _pick_image_block(n, ho, m_target=256):
    # Bimg so that M = Bimg*Ho ~ m_target (MXU row dim), Bimg divides N, and the
    # row blocks stay sublane aligned.  (With only a couple of images you cannot
    # also have many grid steps for deep pipelining / v7x 2-core sharding.)
    b = max(1, min(n, max(1, m_target // max(ho, 1))))
    while b > 1 and n % b:
        b -= 1
    if (b * ho) % 8 and n // b > 1:
        b = n                    # single full-array step: no (8,128) block constraint
    return b


def norm_conv(x_nchw, weight_oihw, gamma, beta, stride, *, eps=1e-5):
    N, Cin, H, W = x_nchw.shape
    Cout = weight_oihw.shape[0]
    Ho = (H + 2 - 3) // stride + 1
    Wo = (W + 2 - 3) // stride + 1
    Hp = H + 2
    K = W * Cin                  # W-padding folded into B -> K uses unpadded W
    L_out = Wo * Cout

    # ---- input glue: NCHW -> (N, Hp, W*Cin) bf16, H-pad only.  XLA fuses the
    # transpose + pad + cast into one pass over the input.
    x = jnp.transpose(x_nchw, (0, 2, 3, 1)).reshape(N, H, K)
    x2 = jnp.pad(x, ((0, 0), (1, 1), (0, 0))).astype(jnp.bfloat16)

    # ---- banded conv weights, one slab per kernel row kh (W-pad folded in):
    #   B[kh, w*Cin+ci, wo*Cout+co] = weight[co, ci, kh, kw]  iff  w == wo*stride+kw-1
    wt = jnp.transpose(weight_oihw, (2, 3, 1, 0)).astype(jnp.float32)   # (kh,kw,ci,co)
    sel = np.zeros((3, W, Wo), np.float32)
    for kw in range(3):
        w_idx = np.arange(Wo) * stride + kw - 1
        ok = (w_idx >= 0) & (w_idx < W)
        sel[kw, w_idx[ok], np.arange(Wo)[ok]] = 1.0
    B = jnp.einsum("kwv,hkic->hwivc", jnp.asarray(sel), wt)
    B = B.reshape(3, K, L_out).astype(jnp.bfloat16)

    bimg = _pick_image_block(N, Ho)
    num_blocks = N // bimg
    m_blk = bimg * Ho

    cparams = pltpu.CompilerParams(
        dimension_semantics=("parallel",),
        vmem_limit_bytes=32 * 1024 * 1024,
    )
    acc_scratch = pltpu.VMEM((m_blk, L_out), jnp.float32)

    # ---- pass 1: conv (bf16 MXU, f32 acc) -> per-block BN partial sums only ------
    stats = pl.pallas_call(
        functools.partial(_stats_kernel, bimg=bimg, ho=Ho, stride=stride),
        out_shape=jax.ShapeDtypeStruct((num_blocks, 2, L_out), jnp.float32),
        grid=(num_blocks,),
        in_specs=[
            pl.BlockSpec((bimg, Hp, K), lambda n: (n, 0, 0)),
            pl.BlockSpec((3, K, L_out), lambda n: (0, 0, 0)),
        ],
        out_specs=pl.BlockSpec((1, 2, L_out), lambda n: (n, 0, 0)),
        scratch_shapes=[acc_scratch],
        compiler_params=cparams,
    )(x2, B)

    # ---- global BN stats -> per-channel scale/shift (tiny, plain JAX, f32) -------
    tot = jnp.sum(stats, axis=0)                              # (2, L_out)
    sum_y = jnp.sum(tot[0].reshape(Wo, Cout), axis=0)         # (Cout,)
    sum_y2 = jnp.sum(tot[1].reshape(Wo, Cout), axis=0)
    m_tot = float(N * Ho * Wo)
    mean = sum_y / m_tot
    var = jnp.maximum(sum_y2 / m_tot - mean * mean, 0.0)      # biased var, clamped
    inv = lax.rsqrt(var + eps)
    scale = gamma.astype(jnp.float32) * inv
    shift = beta.astype(jnp.float32) - mean * scale
    scale_row = jnp.tile(scale, Wo).reshape(1, L_out)          # lane -> channel = lane % Cout
    shift_row = jnp.tile(shift, Wo).reshape(1, L_out)

    # ---- pass 2: recompute conv, fused scale/shift + ReLU, lane-dense store ------
    out2d = pl.pallas_call(
        functools.partial(_conv_bn_relu_kernel, bimg=bimg, ho=Ho, stride=stride),
        out_shape=jax.ShapeDtypeStruct((N * Ho, L_out), jnp.float32),
        grid=(num_blocks,),
        in_specs=[
            pl.BlockSpec((bimg, Hp, K), lambda n: (n, 0, 0)),
            pl.BlockSpec((3, K, L_out), lambda n: (0, 0, 0)),
            pl.BlockSpec((1, L_out), lambda n: (0, 0)),
            pl.BlockSpec((1, L_out), lambda n: (0, 0)),
        ],
        out_specs=pl.BlockSpec((m_blk, L_out), lambda n: (n, 0)),
        scratch_shapes=[acc_scratch],
        compiler_params=cparams,
    )(x2, B, scale_row, shift_row)

    out = out2d.reshape(N, Ho, Wo, Cout)
    return jnp.transpose(out, (0, 3, 1, 2))                    # module contract is NCHW


norm_conv_jit = jax.jit(norm_conv, static_argnums=(4,))


def reference(x_nchw, weight_oihw, gamma, beta, stride):
    # Pure-JAX reference (matches PyTorch NormConv forward in train mode).
    y = lax.conv_general_dilated(
        x_nchw, weight_oihw, window_strides=(stride, stride),
        padding=((1, 1), (1, 1)),
        dimension_numbers=("NCHW", "OIHW", "NCHW"))
    mean = jnp.mean(y, axis=(0, 2, 3), keepdims=True)
    var = jnp.var(y, axis=(0, 2, 3), keepdims=True)
    yhat = (y - mean) * lax.rsqrt(var + 1e-5)
    out = yhat * gamma.reshape(1, -1, 1, 1) + beta.reshape(1, -1, 1, 1)
    return jnp.maximum(out, 0.0)


if __name__ == "__main__":
    key = jax.random.PRNGKey(0)
    kx, kw, kg, kb = jax.random.split(key, 4)

    # Small shapes consistent with NormConv(inp=4, oup=8, stride=1).
    N, Cin, H, W = 2, 4, 16, 16
    Cout, stride = 8, 1

    x = jax.random.normal(kx, (N, Cin, H, W), dtype=jnp.float32)
    weight = jax.random.normal(kw, (Cout, Cin, 3, 3), dtype=jnp.float32) * 0.1
    gamma = jax.random.uniform(kg, (Cout,), minval=0.5, maxval=1.5, dtype=jnp.float32)
    beta = jax.random.normal(kb, (Cout,), dtype=jnp.float32) * 0.1

    out = jax.block_until_ready(norm_conv_jit(x, weight, gamma, beta, stride))

    # Reference is evaluated on the same bf16-quantized operands the kernel's MXU
    # sees (all BN / normalization math is f32 in both), so the remaining difference
    # is only f32 accumulation order.
    xq = x.astype(jnp.bfloat16).astype(jnp.float32)
    wq = weight.astype(jnp.bfloat16).astype(jnp.float32)
    ref = reference(xq, wq, gamma, beta, stride)

    Ho = (H + 2 - 3) // stride + 1
    Wo = (W + 2 - 3) // stride + 1
    assert out.shape == (N, Cout, Ho, Wo), out.shape
    max_err = float(jnp.max(jnp.abs(out - ref)))
    assert jnp.allclose(out, ref, atol=2e-4, rtol=2e-4), max_err
    print("KERNEL_OK")
</pallas_src>

<mosaic_0001>
module attributes {stable_mosaic.version = 11 : i64} {
  func.func @_stats_kernel(%arg0: i32, %arg1: memref<2x18x64xbf16, #tpu.memory_space<vmem>>, %arg2: memref<3x64x128xbf16, #tpu.memory_space<vmem>>, %arg3: memref<1x2x128xf32, #tpu.memory_space<vmem>>, %arg4: memref<32x128xf32, #tpu.memory_space<vmem>>) attributes {dimension_semantics = [#tpu.dimension_semantics<parallel>], iteration_bounds = array<i64: 1>, scalar_prefetch = 0 : i64, scratch_operands = 1 : i64, tpu.core_type = #tpu.core_type<tc>, window_params = [{transform_indices = @transform_0, window_bounds = array<i64: 2, 18, 64>}, {pipeline_mode = #tpu.pipeline_mode<synchronous>, transform_indices = @transform_1, window_bounds = array<i64: 3, 64, 128>}, {transform_indices = @transform_2, window_bounds = array<i64: 1, 2, 128>}]} {
    %c0 = arith.constant 0 : index
    %c0_0 = arith.constant 0 : index
    %c0_1 = arith.constant 0 : index
    %0 = vector.load %arg1[%c0, %c0_0, %c0_1] : memref<2x18x64xbf16, #tpu.memory_space<vmem>>, vector<2x16x64xbf16>
    %1 = vector.shape_cast %0 : vector<2x16x64xbf16> to vector<32x64xbf16>
    %c0_2 = arith.constant 0 : index
    %c0_3 = arith.constant 0 : index
    %c0_4 = arith.constant 0 : index
    %2 = vector.load %arg2[%c0_2, %c0_3, %c0_4] : memref<3x64x128xbf16, #tpu.memory_space<vmem>>, vector<1x64x128xbf16>
    %3 = vector.shape_cast %2 : vector<1x64x128xbf16> to vector<64x128xbf16>
    %cst = arith.constant dense<0.000000e+00> : vector<32x128xf32>
    %4 = tpu.matmul %1, %3, %cst {dimension_numbers = #tpu.dot_dimension_numbers<[1], [0], [0], [1], [0, 0, 1, 1], [], []>} : vector<32x64xbf16>, vector<64x128xbf16>, vector<32x128xf32> -> vector<32x128xf32>
    %c0_5 = arith.constant 0 : index
    %c0_6 = arith.constant 0 : index
    %5 = vector.load %arg4[%c0_5, %c0_6] : memref<32x128xf32, #tpu.memory_space<vmem>>, vector<32x128xf32>
    tpu.vector_store %arg4[%c0_5, %c0_6], %4 {strides = array<i32>} : memref<32x128xf32, #tpu.memory_space<vmem>>, vector<32x128xf32>,
    %c0_7 = arith.constant 0 : index
    %c1 = arith.constant 1 : index
    %c0_8 = arith.constant 0 : index
    %6 = vector.load %arg1[%c0_7, %c1, %c0_8] : memref<2x18x64xbf16, #tpu.memory_space<vmem>>, vector<2x16x64xbf16>
    %7 = vector.shape_cast %6 : vector<2x16x64xbf16> to vector<32x64xbf16>
    %c1_9 = arith.constant 1 : index
    %c0_10 = arith.constant 0 : index
    %c0_11 = arith.constant 0 : index
    %8 = vector.load %arg2[%c1_9, %c0_10, %c0_11] : memref<3x64x128xbf16, #tpu.memory_space<vmem>>, vector<1x64x128xbf16>
    %9 = vector.shape_cast %8 : vector<1x64x128xbf16> to vector<64x128xbf16>
    %cst_12 = arith.constant dense<0.000000e+00> : vector<32x128xf32>
    %10 = tpu.matmul %7, %9, %cst_12 {dimension_numbers = #tpu.dot_dimension_numbers<[1], [0], [0], [1], [0, 0, 1, 1], [], []>} : vector<32x64xbf16>, vector<64x128xbf16>, vector<32x128xf32> -> vector<32x128xf32>
    %c0_13 = arith.constant 0 : index
    %c0_14 = arith.constant 0 : index
    %11 = vector.load %arg4[%c0_13, %c0_14] : memref<32x128xf32, #tpu.memory_space<vmem>>, vector<32x128xf32>
    %12 = arith.addf %11, %10 : vector<32x128xf32>
    %c0_15 = arith.constant 0 : index
    %c0_16 = arith.constant 0 : index
    %13 = vector.load %arg4[%c0_15, %c0_16] : memref<32x128xf32, #tpu.memory_space<vmem>>, vector<32x128xf32>
    tpu.vector_store %arg4[%c0_15, %c0_16], %12 {strides = array<i32>} : memref<32x128xf32, #tpu.memory_space<vmem>>, vector<32x128xf32>,
    %c0_17 = arith.constant 0 : index
    %c2 = arith.constant 2 : index
    %c0_18 = arith.constant 0 : index
    %14 = vector.load %arg1[%c0_17, %c2, %c0_18] : memref<2x18x64xbf16, #tpu.memory_space<vmem>>, vector<2x16x64xbf16>
    %15 = vector.shape_cast %14 : vector<2x16x64xbf16> to vector<32x64xbf16>
    %c2_19 = arith.constant 2 : index
    %c0_20 = arith.constant 0 : index
    %c0_21 = arith.constant 0 : index
    %16 = vector.load %arg2[%c2_19, %c0_20, %c0_21] : memref<3x64x128xbf16, #tpu.memory_space<vmem>>, vector<1x64x128xbf16>
    %17 = vector.shape_cast %16 : vector<1x64x128xbf16> to vector<64x128xbf16>
    %cst_22 = arith.constant dense<0.000000e+00> : vector<32x128xf32>
    %18 = tpu.matmul %15, %17, %cst_22 {dimension_numbers = #tpu.dot_dimension_numbers<[1], [0], [0], [1], [0, 0, 1, 1], [], []>} : vector<32x64xbf16>, vector<64x128xbf16>, vector<32x128xf32> -> vector<32x128xf32>
    %c0_23 = arith.constant 0 : index
    %c0_24 = arith.constant 0 : index
    %19 = vector.load %arg4[%c0_23, %c0_24] : memref<32x128xf32, #tpu.memory_space<vmem>>, vector<32x128xf32>
    %20 = arith.addf %19, %18 : vector<32x128xf32>
    %c0_25 = arith.constant 0 : index
    %c0_26 = arith.constant 0 : index
    %21 = vector.load %arg4[%c0_25, %c0_26] : memref<32x128xf32, #tpu.memory_space<vmem>>, vector<32x128xf32>
    tpu.vector_store %arg4[%c0_25, %c0_26], %20 {strides = array<i32>} : memref<32x128xf32, #tpu.memory_space<vmem>>, vector<32x128xf32>,
    %c0_27 = arith.constant 0 : index
    %c0_28 = arith.constant 0 : index
    %22 = vector.load %arg4[%c0_27, %c0_28] : memref<32x128xf32, #tpu.memory_space<vmem>>, vector<32x128xf32>
    %cst_29 = arith.constant dense<0.000000e+00> : vector<128xf32>
    %23 = vector.multi_reduction <add>, %22, %cst_29 [0] : vector<32x128xf32> to vector<128xf32>
    %24 = vector.shape_cast %23 : vector<128xf32> to vector<1x128xf32>
    %25 = arith.mulf %22, %22 : vector<32x128xf32>
    %cst_30 = arith.constant dense<0.000000e+00> : vector<128xf32>
    %26 = vector.multi_reduction <add>, %25, %cst_30 [0] : vector<32x128xf32> to vector<128xf32>
    %27 = vector.shape_cast %26 : vector<128xf32> to vector<1x128xf32>
    %28 = tpu.concatenate %24, %27 in 0 : vector<1x128xf32>, vector<1x128xf32> -> vector<2x128xf32>
    %c0_31 = arith.constant 0 : index
    %c0_32 = arith.constant 0 : index
    %c0_33 = arith.constant 0 : index
    %29 = vector.load %arg3[%c0_31, %c0_32, %c0_33] : memref<1x2x128xf32, #tpu.memory_space<vmem>>, vector<1x2x128xf32>
    %30 = vector.shape_cast %29 : vector<1x2x128xf32> to vector<2x128xf32>
    %31 = vector.shape_cast %28 : vector<2x128xf32> to vector<1x2x128xf32>
    tpu.vector_store %arg3[%c0_31, %c0_32, %c0_33], %31 {strides = array<i32>} : memref<1x2x128xf32, #tpu.memory_space<vmem>>, vector<1x2x128xf32>,
    return
  }
  func.func @transform_0(%arg0: i32) -> (i32, i32, i32) {
    %c0_i32 = arith.constant 0 : i32
    %c0_i32_0 = arith.constant 0 : i32
    %c0_i32_1 = arith.constant 0 : i32
    return %arg0, %c0_i32, %c0_i32_0 : i32, i32, i32
  }
  func.func @transform_1(%arg0: i32) -> (i32, i32, i32) {
    %c0_i32 = arith.constant 0 : i32
    %c0_i32_0 = arith.constant 0 : i32
    %c0_i32_1 = arith.constant 0 : i32
    %c0_i32_2 = arith.constant 0 : i32
    return %c0_i32, %c0_i32_0, %c0_i32_1 : i32, i32, i32
  }
  func.func @transform_2(%arg0: i32) -> (i32, i32, i32) {
    %c0_i32 = arith.constant 0 : i32
    %c0_i32_0 = arith.constant 0 : i32
    %c0_i32_1 = arith.constant 0 : i32
    return %arg0, %c0_i32, %c0_i32_0 : i32, i32, i32
  }
}

module attributes {stable_mosaic.version = 11 : i64} {
  func.func @_conv_bn_relu_kernel(%arg0: i32, %arg1: memref<2x18x64xbf16, #tpu.memory_space<vmem>>, %arg2: memref<3x64x128xbf16, #tpu.memory_space<vmem>>, %arg3: memref<1x128xf32, #tpu.memory_space<vmem>>, %arg4: memref<1x128xf32, #tpu.memory_space<vmem>>, %arg5: memref<32x128xf32, #tpu.memory_space<vmem>>, %arg6: memref<32x128xf32, #tpu.memory_space<vmem>>) attributes {dimension_semantics = [#tpu.dimension_semantics<parallel>], iteration_bounds = array<i64: 1>, scalar_prefetch = 0 : i64, scratch_operands = 1 : i64, tpu.core_type = #tpu.core_type<tc>, window_params = [{transform_indices = @transform_0, window_bounds = array<i64: 2, 18, 64>}, {pipeline_mode = #tpu.pipeline_mode<synchronous>, transform_indices = @transform_1, window_bounds = array<i64: 3, 64, 128>}, {pipeline_mode = #tpu.pipeline_mode<synchronous>, transform_indices = @transform_2, window_bounds = array<i64: 1, 128>}, {pipeline_mode = #tpu.pipeline_mode<synchronous>, transform_indices = @transform_3, window_bounds = array<i64: 1, 128>}, {transform_indices = @transform_4, window_bounds = array<i64: 32, 128>}]} {
    %c0 = arith.constant 0 : index
    %c0_0 = arith.constant 0 : index
    %c0_1 = arith.constant 0 : index
    %0 = vector.load %arg1[%c0, %c0_0, %c0_1] : memref<2x18x64xbf16, #tpu.memory_space<vmem>>, vector<2x16x64xbf16>
    %1 = vector.shape_cast %0 : vector<2x16x64xbf16> to vector<32x64xbf16>
    %c0_2 = arith.constant 0 : index
    %c0_3 = arith.constant 0 : index
    %c0_4 = arith.constant 0 : index
    %2 = vector.load %arg2[%c0_2, %c0_3, %c0_4] : memref<3x64x128xbf16, #tpu.memory_space<vmem>>, vector<1x64x128xbf16>
    %3 = vector.shape_cast %2 : vector<1x64x128xbf16> to vector<64x128xbf16>
    %cst = arith.constant dense<0.000000e+00> : vector<32x128xf32>
    %4 = tpu.matmul %1, %3, %cst {dimension_numbers = #tpu.dot_dimension_numbers<[1], [0], [0], [1], [0, 0, 1, 1], [], []>} : vector<32x64xbf16>, vector<64x128xbf16>, vector<32x128xf32> -> vector<32x128xf32>
    %c0_5 = arith.constant 0 : index
    %c0_6 = arith.constant 0 : index
    %5 = vector.load %arg6[%c0_5, %c0_6] : memref<32x128xf32, #tpu.memory_space<vmem>>, vector<32x128xf32>
    tpu.vector_store %arg6[%c0_5, %c0_6], %4 {strides = array<i32>} : memref<32x128xf32, #tpu.memory_space<vmem>>, vector<32x128xf32>,
    %c0_7 = arith.constant 0 : index
    %c1 = arith.constant 1 : index
    %c0_8 = arith.constant 0 : index
    %6 = vector.load %arg1[%c0_7, %c1, %c0_8] : memref<2x18x64xbf16, #tpu.memory_space<vmem>>, vector<2x16x64xbf16>
    %7 = vector.shape_cast %6 : vector<2x16x64xbf16> to vector<32x64xbf16>
    %c1_9 = arith.constant 1 : index
    %c0_10 = arith.constant 0 : index
    %c0_11 = arith.constant 0 : index
    %8 = vector.load %arg2[%c1_9, %c0_10, %c0_11] : memref<3x64x128xbf16, #tpu.memory_space<vmem>>, vector<1x64x128xbf16>
    %9 = vector.shape_cast %8 : vector<1x64x128xbf16> to vector<64x128xbf16>
    %cst_12 = arith.constant dense<0.000000e+00> : vector<32x128xf32>
    %10 = tpu.matmul %7, %9, %cst_12 {dimension_numbers = #tpu.dot_dimension_numbers<[1], [0], [0], [1], [0, 0, 1, 1], [], []>} : vector<32x64xbf16>, vector<64x128xbf16>, vector<32x128xf32> -> vector<32x128xf32>
    %c0_13 = arith.constant 0 : index
    %c0_14 = arith.constant 0 : index
    %11 = vector.load %arg6[%c0_13, %c0_14] : memref<32x128xf32, #tpu.memory_space<vmem>>, vector<32x128xf32>
    %12 = arith.addf %11, %10 : vector<32x128xf32>
    %c0_15 = arith.constant 0 : index
    %c0_16 = arith.constant 0 : index
    %13 = vector.load %arg6[%c0_15, %c0_16] : memref<32x128xf32, #tpu.memory_space<vmem>>, vector<32x128xf32>
    tpu.vector_store %arg6[%c0_15, %c0_16], %12 {strides = array<i32>} : memref<32x128xf32, #tpu.memory_space<vmem>>, vector<32x128xf32>,
    %c0_17 = arith.constant 0 : index
    %c2 = arith.constant 2 : index
    %c0_18 = arith.constant 0 : index
    %14 = vector.load %arg1[%c0_17, %c2, %c0_18] : memref<2x18x64xbf16, #tpu.memory_space<vmem>>, vector<2x16x64xbf16>
    %15 = vector.shape_cast %14 : vector<2x16x64xbf16> to vector<32x64xbf16>
    %c2_19 = arith.constant 2 : index
    %c0_20 = arith.constant 0 : index
    %c0_21 = arith.constant 0 : index
    %16 = vector.load %arg2[%c2_19, %c0_20, %c0_21] : memref<3x64x128xbf16, #tpu.memory_space<vmem>>, vector<1x64x128xbf16>
    %17 = vector.shape_cast %16 : vector<1x64x128xbf16> to vector<64x128xbf16>
    %cst_22 = arith.constant dense<0.000000e+00> : vector<32x128xf32>
    %18 = tpu.matmul %15, %17, %cst_22 {dimension_numbers = #tpu.dot_dimension_numbers<[1], [0], [0], [1], [0, 0, 1, 1], [], []>} : vector<32x64xbf16>, vector<64x128xbf16>, vector<32x128xf32> -> vector<32x128xf32>
    %c0_23 = arith.constant 0 : index
    %c0_24 = arith.constant 0 : index
    %19 = vector.load %arg6[%c0_23, %c0_24] : memref<32x128xf32, #tpu.memory_space<vmem>>, vector<32x128xf32>
    %20 = arith.addf %19, %18 : vector<32x128xf32>
    %c0_25 = arith.constant 0 : index
    %c0_26 = arith.constant 0 : index
    %21 = vector.load %arg6[%c0_25, %c0_26] : memref<32x128xf32, #tpu.memory_space<vmem>>, vector<32x128xf32>
    tpu.vector_store %arg6[%c0_25, %c0_26], %20 {strides = array<i32>} : memref<32x128xf32, #tpu.memory_space<vmem>>, vector<32x128xf32>,
    %c0_27 = arith.constant 0 : index
    %c0_28 = arith.constant 0 : index
    %22 = vector.load %arg6[%c0_27, %c0_28] : memref<32x128xf32, #tpu.memory_space<vmem>>, vector<32x128xf32>
    %c0_29 = arith.constant 0 : index
    %c0_30 = arith.constant 0 : index
    %23 = vector.load %arg3[%c0_29, %c0_30] : memref<1x128xf32, #tpu.memory_space<vmem>>, vector<1x128xf32>
    %24 = vector.broadcast %23 : vector<1x128xf32> to vector<32x128xf32>
    %25 = arith.mulf %22, %24 : vector<32x128xf32>
    %c0_31 = arith.constant 0 : index
    %c0_32 = arith.constant 0 : index
    %26 = vector.load %arg4[%c0_31, %c0_32] : memref<1x128xf32, #tpu.memory_space<vmem>>, vector<1x128xf32>
    %27 = vector.broadcast %26 : vector<1x128xf32> to vector<32x128xf32>
    %28 = arith.addf %25, %27 : vector<32x128xf32>
    %cst_33 = arith.constant 0.000000e+00 : f32
    %29 = vector.broadcast %cst_33 : f32 to vector<32x128xf32>
    %30 = arith.maximumf %28, %29 : vector<32x128xf32>
    %c0_34 = arith.constant 0 : index
    %c0_35 = arith.constant 0 : index
    %31 = vector.load %arg5[%c0_34, %c0_35] : memref<32x128xf32, #tpu.memory_space<vmem>>, vector<32x128xf32>
    tpu.vector_store %arg5[%c0_34, %c0_35], %30 {strides = array<i32>} : memref<32x128xf32, #tpu.memory_space<vmem>>, vector<32x128xf32>,
    return
  }
  func.func @transform_0(%arg0: i32) -> (i32, i32, i32) {
    %c0_i32 = arith.constant 0 : i32
    %c0_i32_0 = arith.constant 0 : i32
    %c0_i32_1 = arith.constant 0 : i32
    return %arg0, %c0_i32, %c0_i32_0 : i32, i32, i32
  }
  func.func @transform_1(%arg0: i32) -> (i32, i32, i32) {
    %c0_i32 = arith.constant 0 : i32
    %c0_i32_0 = arith.constant 0 : i32
    %c0_i32_1 = arith.constant 0 : i32
    %c0_i32_2 = arith.constant 0 : i32
    return %c0_i32, %c0_i32_0, %c0_i32_1 : i32, i32, i32
  }
  func.func @transform_2(%arg0: i32) -> (i32, i32) {
    %c0_i32 = arith.constant 0 : i32
    %c0_i32_0 = arith.constant 0 : i32
    %c0_i32_1 = arith.constant 0 : i32
    return %c0_i32, %c0_i32_0 : i32, i32
  }
  func.func @transform_3(%arg0: i32) -> (i32, i32) {
    %c0_i32 = arith.constant 0 : i32
    %c0_i32_0 = arith.constant 0 : i32
    %c0_i32_1 = arith.constant 0 : i32
    return %c0_i32, %c0_i32_0 : i32, i32
  }
  func.func @transform_4(%arg0: i32) -> (i32, i32) {
    %c0_i32 = arith.constant 0 : i32
    %c0_i32_0 = arith.constant 0 : i32
    return %arg0, %c0_i32 : i32, i32
  }
}

</mosaic_0001>

<llo_original>
// kernel: squeeze.2
$region0: #{squeeze.2}
  %s0 = inlined_call_operand.vmem [shape: f32[128], index: 0, kind: input, shape index: {}]
  %s1 = inlined_call_operand.vmem [shape: f32[16,8], index: 1, kind: output, shape index: {}]
  $region1: #{squeeze.2} parent=0
    #allocation0 [shape = 'u8[4096]{0}', space=vmem, size = 0x1000, scoped, tag = 'scoped mem for input reshape']
    %s3 = sshllo.u32 0, 1
    %v4 = vld [vmem:[%s0] sm:%s3]
    %5 = vst [vmem:[#allocation0] sm:%s3] %v4
    %v6 = vld [vmem:[#allocation0] sm:$0x1]
    %vm7 = vcmask 64512
    %8 = vst.msk [vmem:[%s1] sm:$0x1] %vm7, %v6
    %v9 = vld [vmem:[#allocation0] sm:$0x1]
    %10 = vrot.lane.b32.xlu0 %v9, 120
    %v11 = vpop.permute.xlu0 %10
    %vm12 = vcmask 64512
    %s13 = scalar_lea.vmem %s1, 1
    %14 = vst.msk [vmem:[%s13] sm:$0x1] %vm12, %v11
    %v15 = vld [vmem:[#allocation0] sm:$0x1]
    %16 = vrot.lane.b32.xlu0 %v15, 112
    %v17 = vpop.permute.xlu0 %16
    %vm18 = vcmask 64512
    %s19 = scalar_lea.vmem %s1, 2
    %20 = vst.msk [vmem:[%s19] sm:$0x1] %vm18, %v17
    %v21 = vld [vmem:[#allocation0] sm:$0x1]
    %22 = vrot.lane.b32.xlu0 %v21, 104
    %v23 = vpop.permute.xlu0 %22
    %vm24 = vcmask 64512
    %s25 = scalar_lea.vmem %s1, 3
    %26 = vst.msk [vmem:[%s25] sm:$0x1] %vm24, %v23
    %v27 = vld [vmem:[#allocation0] sm:$0x1]
    %28 = vrot.lane.b32.xlu0 %v27, 96
    %v29 = vpop.permute.xlu0 %28
    %vm30 = vcmask 64512
    %s31 = scalar_lea.vmem %s1, 4
    %32 = vst.msk [vmem:[%s31] sm:$0x1] %vm30, %v29
    %v33 = vld [vmem:[#allocation0] sm:$0x1]
    %34 = vrot.lane.b32.xlu0 %v33, 88
    %v35 = vpop.permute.xlu0 %34
    %vm36 = vcmask 64512
    %s37 = scalar_lea.vmem %s1, 5
    %38 = vst.msk [vmem:[%s37] sm:$0x1] %vm36, %v35
    %v39 = vld [vmem:[#allocation0] sm:$0x1]
    %40 = vrot.lane.b32.xlu0 %v39, 80
    %v41 = vpop.permute.xlu0 %40
    %vm42 = vcmask 64512
    %s43 = scalar_lea.vmem %s1, 6
    %44 = vst.msk [vmem:[%s43] sm:$0x1] %vm42, %v41
    %v45 = vld [vmem:[#allocation0] sm:$0x1]
    %46 = vrot.lane.b32.xlu0 %v45, 72
    %v47 = vpop.permute.xlu0 %46
    %vm48 = vcmask 64512
    %s49 = scalar_lea.vmem %s1, 7
    %50 = vst.msk [vmem:[%s49] sm:$0x1] %vm48, %v47
    %v51 = vld [vmem:[#allocation0] sm:$0x1]
    %52 = vrot.lane.b32.xlu0 %v51, 64
    %v53 = vpop.permute.xlu0 %52
    %vm54 = vcmask 64512
    %s55 = scalar_lea.vmem %s1, 8
    %56 = vst.msk [vmem:[%s55] sm:$0x1] %vm54, %v53
    %v57 = vld [vmem:[#allocation0] sm:$0x1]
    %58 = vrot.lane.b32.xlu0 %v57, 56
    %v59 = vpop.permute.xlu0 %58
    %vm60 = vcmask 64512
    %s61 = scalar_lea.vmem %s1, 9
    %62 = vst.msk [vmem:[%s61] sm:$0x1] %vm60, %v59
    %v63 = vld [vmem:[#allocation0] sm:$0x1]
    %64 = vrot.lane.b32.xlu0 %v63, 48
    %v65 = vpop.permute.xlu0 %64
    %vm66 = vcmask 64512
    %s67 = scalar_lea.vmem %s1, 10
    %68 = vst.msk [vmem:[%s67] sm:$0x1] %vm66, %v65
    %v69 = vld [vmem:[#allocation0] sm:$0x1]
    %70 = vrot.lane.b32.xlu0 %v69, 40
    %v71 = vpop.permute.xlu0 %70
    %vm72 = vcmask 64512
    %s73 = scalar_lea.vmem %s1, 11
    %74 = vst.msk [vmem:[%s73] sm:$0x1] %vm72, %v71
    %v75 = vld [vmem:[#allocation0] sm:$0x1]
    %76 = vrot.lane.b32.xlu0 %v75, 32
    %v77 = vpop.permute.xlu0 %76
    %vm78 = vcmask 64512
    %s79 = scalar_lea.vmem %s1, 12
    %80 = vst.msk [vmem:[%s79] sm:$0x1] %vm78, %v77
    %v81 = vld [vmem:[#allocation0] sm:$0x1]
    %82 = vrot.lane.b32.xlu0 %v81, 24
    %v83 = vpop.permute.xlu0 %82
    %vm84 = vcmask 64512
    %s85 = scalar_lea.vmem %s1, 13
    %86 = vst.msk [vmem:[%s85] sm:$0x1] %vm84, %v83
    %v87 = vld [vmem:[#allocation0] sm:$0x1]
    %88 = vrot.lane.b32.xlu0 %v87, 16
    %v89 = vpop.permute.xlu0 %88
    %vm90 = vcmask 64512
    %s91 = scalar_lea.vmem %s1, 14
    %92 = vst.msk [vmem:[%s91] sm:$0x1] %vm90, %v89
    %v93 = vld [vmem:[#allocation0] sm:$0x1]
    %94 = vrot.lane.b32.xlu0 %v93, 8
    %v95 = vpop.permute.xlu0 %94
    %vm96 = vcmask 64512
    %s97 = scalar_lea.vmem %s1, 15
    %98 = vst.msk [vmem:[%s97] sm:$0x1] %vm96, %v95

// kernel: tile.13
$region0: #{tile.13}
  #allocation0 [shape = 's32[1]{0}', space=sflag, size = 0x4, scoped, tag = 'scoped memory for tile.13']
  %s0 = inlined_call_operand.vmem [shape: f32[8], index: 0, kind: input, shape index: {}]
  %s1 = inlined_call_operand.vmem [shape: f32[16,8], index: 1, kind: output, shape index: {}]
  // Predicated region
  $region2: #{tile.13} parent=0 // pred_check
    _
  $region3: #{tile.13} parent=0 // pred_check_branch
    %3 = sbr.rel (0) target = $region5
  $region4: #{tile.13} parent=0 // pred_region
    _
  $region5: #{tile.13} parent=0 // pred_fallthru
    _
  %v4 = vld [vmem:[%s0] ss:$0 sm:$0xff]
  %5 = vst [vmem:[%s1] sm:$0xff] %v4
  %s6 = scalar_lea.vmem %s1, 8
  %7 = vst [vmem:[%s6] sm:$0xff] %v4

// kernel: tile.14
$region0: #{tile.14}
  %s0 = inlined_call_operand.vmem [shape: f32[16,8], index: 0, kind: input, shape index: {}]
  %s1 = inlined_call_operand.vmem [shape: f32[1,128], index: 1, kind: output, shape index: {}]
  $region1: #{tile.14} parent=0
    #allocation0 [shape = 'u8[4096]{0}', space=vmem, size = 0x1000, scoped, tag = 'scoped mem for output reshape']
    %v2 = vld [vmem:[%s0] sm:$0x1]
    %vm3 = vcmask 64512
    %4 = vst.msk [vmem:[#allocation0] sm:$0x1] %vm3, %v2
    %s5 = scalar_lea.vmem %s0, 15
    %v6 = vld [vmem:[%s5] sm:$0x1]
    %7 = vrot.lane.b32.xlu0 %v6, 120
    %v8 = vpop.permute.xlu0 %7
    %vm9 = vcmask 1048512
    %10 = vst.msk [vmem:[#allocation0] sm:$0x1] %vm9, %v8
    %s11 = scalar_lea.vmem %s0, 14
    %v12 = vld [vmem:[%s11] sm:$0x1]
    %13 = vrot.lane.b32.xlu0 %v12, 112
    %v14 = vpop.permute.xlu0 %13
    %vm15 = vcmask 982912
    %16 = vst.msk [vmem:[#allocation0] sm:$0x1] %vm15, %v14
    %s17 = scalar_lea.vmem %s0, 13
    %v18 = vld [vmem:[%s17] sm:$0x1]
    %19 = vrot.lane.b32.xlu0 %v18, 104
    %v20 = vpop.permute.xlu0 %19
    %vm21 = vcmask 917312
    %22 = vst.msk [vmem:[#allocation0] sm:$0x1] %vm21, %v20
    %s23 = scalar_lea.vmem %s0, 12
    %v24 = vld [vmem:[%s23] sm:$0x1]
    %25 = vrot.lane.b32.xlu0 %v24, 96
    %v26 = vpop.permute.xlu0 %25
    %vm27 = vcmask 851712
    %28 = vst.msk [vmem:[#allocation0] sm:$0x1] %vm27, %v26
    %s29 = scalar_lea.vmem %s0, 11
    %v30 = vld [vmem:[%s29] sm:$0x1]
    %31 = vrot.lane.b32.xlu0 %v30, 88
    %v32 = vpop.permute.xlu0 %31
    %vm33 = vcmask 786112
    %34 = vst.msk [vmem:[#allocation0] sm:$0x1] %vm33, %v32
    %s35 = scalar_lea.vmem %s0, 10
    %v36 = vld [vmem:[%s35] sm:$0x1]
    %37 = vrot.lane.b32.xlu0 %v36, 80
    %v38 = vpop.permute.xlu0 %37
    %vm39 = vcmask 720512
    %40 = vst.msk [vmem:[#allocation0] sm:$0x1] %vm39, %v38
    %s41 = scalar_lea.vmem %s0, 9
    %v42 = vld [vmem:[%s41] sm:$0x1]
    %43 = vrot.lane.b32.xlu0 %v42, 72
    %v44 = vpop.permute.xlu0 %43
    %vm45 = vcmask 654912
    %46 = vst.msk [vmem:[#allocation0] sm:$0x1] %vm45, %v44
    %s47 = scalar_lea.vmem %s0, 8
    %v48 = vld [vmem:[%s47] sm:$0x1]
    %49 = vrot.lane.b32.xlu0 %v48, 64
    %v50 = vpop.permute.xlu0 %49
    %vm51 = vcmask 589312
    %52 = vst.msk [vmem:[#allocation0] sm:$0x1] %vm51, %v50
    %s53 = scalar_lea.vmem %s0, 7
    %v54 = vld [vmem:[%s53] sm:$0x1]
    %55 = vrot.lane.b32.xlu0 %v54, 56
    %v56 = vpop.permute.xlu0 %55
    %vm57 = vcmask 523712
    %58 = vst.msk [vmem:[#allocation0] sm:$0x1] %vm57, %v56
    %s59 = scalar_lea.vmem %s0, 6
    %v60 = vld [vmem:[%s59] sm:$0x1]
    %61 = vrot.lane.b32.xlu0 %v60, 48
    %v62 = vpop.permute.xlu0 %61
    %vm63 = vcmask 458112
    %64 = vst.msk [vmem:[#allocation0] sm:$0x1] %vm63, %v62
    %s65 = scalar_lea.vmem %s0, 5
    %v66 = vld [vmem:[%s65] sm:$0x1]
    %67 = vrot.lane.b32.xlu0 %v66, 40
    %v68 = vpop.permute.xlu0 %67
    %vm69 = vcmask 392512
    %70 = vst.msk [vmem:[#allocation0] sm:$0x1] %vm69, %v68
    %s71 = scalar_lea.vmem %s0, 4
    %v72 = vld [vmem:[%s71] sm:$0x1]
    %73 = vrot.lane.b32.xlu0 %v72, 32
    %v74 = vpop.permute.xlu0 %73
    %vm75 = vcmask 326912
    %76 = vst.msk [vmem:[#allocation0] sm:$0x1] %vm75, %v74
    %s77 = scalar_lea.vmem %s0, 3
    %v78 = vld [vmem:[%s77] sm:$0x1]
    %79 = vrot.lane.b32.xlu0 %v78, 24
    %v80 = vpop.permute.xlu0 %79
    %vm81 = vcmask 261312
    %82 = vst.msk [vmem:[#allocation0] sm:$0x1] %vm81, %v80
    %s83 = scalar_lea.vmem %s0, 2
    %v84 = vld [vmem:[%s83] sm:$0x1]
    %85 = vrot.lane.b32.xlu0 %v84, 16
    %v86 = vpop.permute.xlu0 %85
    %vm87 = vcmask 195712
    %88 = vst.msk [vmem:[#allocation0] sm:$0x1] %vm87, %v86
    %s89 = scalar_lea.vmem %s0, 1
    %v90 = vld [vmem:[%s89] sm:$0x1]
    %91 = vrot.lane.b32.xlu0 %v90, 8
    %v92 = vpop.permute.xlu0 %91
    %vm93 = vcmask 130112
    %94 = vst.msk [vmem:[#allocation0] sm:$0x1] %vm93, %v92
    %s96 = sshllo.u32 0, 1
    %v98 = vld [vmem:[#allocation0] sm:%s96]
    %s99 = sshllo.u32 0, 1
    %100 = vst [vmem:[%s1] sm:%s99] %v98

// kernel: norm_conv.2
$region0: #{norm_conv.2}
  #allocation0 [shape = 'u32[]', space=smem, size = 0x4, offset = 0x4, fixed_abs, tag = 'smem constant byte address 0x4 - core index']
  #allocation1 [shape = 'u32[144,128]{1,0:T(1,128)}', space=vmem, size = 0x12000, scoped, tag = 'internal scratch']
  #allocation2 [shape = 'f32[32,128]{1,0:T(8,128)}', space=vmem, size = 0x4000, scoped, tag = 'scratch operand']
  %s0 = inlined_call_operand.vmem [shape: bf16[2,18,64], index: 0, kind: input, shape index: {}]
  %s1 = inlined_call_operand.vmem [shape: bf16[3,64,128], index: 1, kind: input, shape index: {}]
  %s2 = inlined_call_operand.vmem [shape: f32[1,2,128], index: 2, kind: output, shape index: {}]
  %s3 = sld [smem:[#allocation0]]
  $region18: #{norm_conv.2} parent=0
    _
  %s5 = ssub.s32 1, %s3
  %s6 = scalar_select 0, %s5, %s3
  // Predicated region
  $region2: #{norm_conv.2} parent=0 // pred_check
    _
  $region3: #{norm_conv.2} parent=0 // pred_check_branch
    %8 = sbr.rel (0) target = $region5
  $region4: #{norm_conv.2} parent=0 // pred_region
    _
  $region5: #{norm_conv.2} parent=0 // pred_fallthru
    _
  // Predicated region
  $region6: #{norm_conv.2} parent=0 // pred_check
    _
  $region7: #{norm_conv.2} parent=0 // pred_check_branch
    %10 = sbr.rel (0) target = $region9
  $region8: #{norm_conv.2} parent=0 // pred_region
    _
  $region9: #{norm_conv.2} parent=0 // pred_fallthru
    _
  %v12 = vld [vmem:[%s0] sm:$0xf]
  %v13 = vld [vmem:[%s0 + $0x4] sm:$0xf]
  %v14 = vld [vmem:[%s0 + $0xc] sm:$0xf]
  %v15 = vld [vmem:[%s0 + $0x10] sm:$0xf]
  %v16 = vld [vmem:[%s1] sm:$0xf]
  %v17 = vld [vmem:[%s1 + $0x4] sm:$0xf]
  %v18 = vld [vmem:[%s1 + $0x8] sm:$0xf]
  %v19 = vld [vmem:[%s1 + $0xc] sm:$0xf]
  %v20 = vld [vmem:[%s1 + $0x10] sm:$0xf]
  %v21 = vld [vmem:[%s1 + $0x14] sm:$0xf]
  %v22 = vld [vmem:[%s1 + $0x18] sm:$0xf]
  %v23 = vld [vmem:[%s1 + $0x1c] sm:$0xf]
  %v28 = vunpack.c.l.b16 %v12
  %v29 = vunpack.c.l.b16 %v13
  %v30 = vunpack.c.l.b16 %v14
  %v31 = vunpack.c.l.b16 %v15
  %v32 = vpack.c.b16 %v29, %v28
  %v33 = vpack.c.b16 %v31, %v30
  %v42 = vunpack.c.l.b16 %v16
  %v43 = vunpack.c.l.b16 %v17
  %v44 = vunpack.c.l.b16 %v18
  %v45 = vunpack.c.l.b16 %v19
  %v46 = vunpack.c.l.b16 %v20
  %v47 = vunpack.c.l.b16 %v21
  %v48 = vunpack.c.l.b16 %v22
  %v49 = vunpack.c.l.b16 %v23
  %v50 = vpack.c.b16 %v43, %v42
  %v51 = vpack.c.b16 %v45, %v44
  %v52 = vpack.c.b16 %v47, %v46
  %v53 = vpack.c.b16 %v49, %v48
  %vm58 = vcmask 523264
  %v60 = vsel %vm58, %v32, 0
  %v63 = vsel %vm58, %v33, 0
  %65 = vmatprep.subr.bf16.mxu0 0
  %66 = vmatpush1.bf16.msra.mxu0 %v50
  %67 = vmatprep.subr.bf16.mxu0 0
  %68 = vmatpush1.bf16.msra.mxu0 %v51
  %69 = vmatprep.subr.bf16.mxu0 0
  %70 = vmatpush1.bf16.msra.mxu0 %v52
  %71 = vmatprep.subr.bf16.mxu0 0
  %72 = vmatpush1.bf16.msra.mxu0 %v53
  %73 = vmatprep.subr.bf16.mxu0 0
  %74 = vmatpush1.bf16.msra.mxu0 0
  %75 = vmatprep.subr.bf16.mxu0 0
  %76 = vmatpush1.bf16.msra.mxu0 0
  %77 = vmatprep.subr.bf16.mxu0 0
  %78 = vmatpush1.bf16.msra.mxu0 0
  %79 = vmatprep.subr.bf16.mxu0 0
  %80 = vmatpush1.bf16.msra.mxu0 0
  %81 = vmatprep.subr.bf16.mxu0 0
  %82 = vmatpush1.bf16.msra.mxu0 0
  %83 = vmatprep.subr.bf16.mxu0 0
  %84 = vmatpush1.bf16.msra.mxu0 0
  %85 = vmatprep.subr.bf16.mxu0 0
  %86 = vmatpush1.bf16.msra.mxu0 0
  %87 = vmatprep.subr.bf16.mxu0 0
  %88 = vmatpush1.bf16.msra.mxu0 0
  %89 = vmatprep.subr.bf16.mxu0 0
  %90 = vmatpush1.bf16.msra.mxu0 0
  %91 = vmatprep.subr.bf16.mxu0 0
  %92 = vmatpush1.bf16.msra.mxu0 0
  %93 = vmatprep.subr.bf16.mxu0 0
  %94 = vmatpush1.bf16.msra.mxu0 0
  %95 = vmatprep.subr.bf16.mxu0 0
  %96 = vmatpush1.bf16.msra.mxu0 0
  %97 = vmatprep.mubr.bf16.mxu0 0
  %98 = vmatmul.mubr.bf16.gmra.mrb[0].mxu0 %v60
  %v99 = vpop.f32.mrb[0].mxu0
  %v100 = vadd.f32 0.0, %v99
  %v101 = vpop.f32.mrb[0].mxu0
  %v102 = vpop.f32.mrb[0].mxu0
  %v103 = vadd.f32 0.0, %v102
  %v104 = vpop.f32.mrb[0].mxu0
  %105 = vmatprep.mubr.bf16.mxu0 0
  %106 = vmatmul.mubr.bf16.gmra.mrb[0].mxu0 %v63
  %v107 = vpop.f32.mrb[0].mxu0
  %v108 = vadd.f32 0.0, %v107
  %v109 = vpop.f32.mrb[0].mxu0
  %v110 = vpop.f32.mrb[0].mxu0
  %v111 = vadd.f32 0.0, %v110
  %v112 = vpop.f32.mrb[0].mxu0
  %113 = vdwg.mxu0
  %114 = vst [vmem:[#allocation2] sm:$0xff] %v100
  %115 = vst [vmem:[#allocation2 + $0x8] sm:$0xff] %v103
  %116 = vst [vmem:[#allocation2 + $0x10] sm:$0xff] %v108
  %117 = vst [vmem:[#allocation2 + $0x18] sm:$0xff] %v111
  %v118 = vld [vmem:[%s0] sm:$0xf]
  %v119 = vld [vmem:[%s0 + $0x4] sm:$0xf]
  %v120 = vld [vmem:[%s0 + $0x8] sm:$0x1]
  %v121 = vld [vmem:[%s0 + $0xc] sm:$0xf]
  %v122 = vld [vmem:[%s0 + $0x10] sm:$0xf]
  %v123 = vld [vmem:[%s0 + $0x14] sm:$0x1]
  %vm124 = vsmask.f32 3328
  %vm125 = vsmask.f32 7440
  %vm126 = vmor %vm124, %vm125
  %v128 = vshrl.u32 %v118, 16
  %v130 = vrot.slane %v128, 4
  %v131 = vshll.u32 %v118, 16
  %v133 = vrot.slane %v131, 5
  %v134 = vor.u32 %v130, %v133
  %v135 = vrot.slane %v134, 4
  %v137 = vshll.u32 %v119, 16
  %v139 = vrot.slane %v137, 5
  %v140 = vsel %vm126, %v135, %v139
  %v141 = vshrl.u32 %v119, 16
  %v143 = vrot.slane %v141, 4
  %v144 = vor.u32 %v143, %v139
  %v145 = vrot.slane %v144, 4
  %v147 = vshll.u32 %v120, 16
  %v149 = vrot.slane %v147, 5
  %v150 = vsel %vm126, %v145, %v149
  %v152 = vshrl.u32 %v121, 16
  %v154 = vrot.slane %v152, 4
  %v155 = vshll.u32 %v121, 16
  %v157 = vrot.slane %v155, 5
  %v158 = vor.u32 %v154, %v157
  %v159 = vrot.slane %v158, 4
  %v161 = vshll.u32 %v122, 16
  %v163 = vrot.slane %v161, 5
  %v164 = vsel %vm126, %v159, %v163
  %v165 = vshrl.u32 %v122, 16
  %v167 = vrot.slane %v165, 4
  %v168 = vor.u32 %v167, %v163
  %v169 = vrot.slane %v168, 4
  %v171 = vshll.u32 %v123, 16
  %v173 = vrot.slane %v171, 5
  %v174 = vsel %vm126, %v169, %v173
  %s175 = scalar_lea.vmem %s1, 32
  %v176 = vld [vmem:[%s175] sm:$0xf]
  %v177 = vld [vmem:[%s175 + $0x4] sm:$0xf]
  %v178 = vld [vmem:[%s175 + $0x8] sm:$0xf]
  %v179 = vld [vmem:[%s175 + $0xc] sm:$0xf]
  %v180 = vld [vmem:[%s175 + $0x10] sm:$0xf]
  %v181 = vld [vmem:[%s175 + $0x14] sm:$0xf]
  %v182 = vld [vmem:[%s175 + $0x18] sm:$0xf]
  %v183 = vld [vmem:[%s175 + $0x1c] sm:$0xf]
  %v184 = vunpack.c.l.b16 %v140
  %v185 = vunpack.c.l.b16 %v150
  %v186 = vunpack.c.l.b16 %v164
  %v187 = vunpack.c.l.b16 %v174
  %v188 = vpack.c.b16 %v185, %v184
  %v189 = vpack.c.b16 %v187, %v186
  %v198 = vunpack.c.l.b16 %v176
  %v199 = vunpack.c.l.b16 %v177
  %v200 = vunpack.c.l.b16 %v178
  %v201 = vunpack.c.l.b16 %v179
  %v202 = vunpack.c.l.b16 %v180
  %v203 = vunpack.c.l.b16 %v181
  %v204 = vunpack.c.l.b16 %v182
  %v205 = vunpack.c.l.b16 %v183
  %v206 = vpack.c.b16 %v199, %v198
  %v207 = vpack.c.b16 %v201, %v200
  %v208 = vpack.c.b16 %v203, %v202
  %v209 = vpack.c.b16 %v205, %v204
  %v215 = vsel %vm58, %v188, 0
  %v218 = vsel %vm58, %v189, 0
  %220 = vmatprep.subr.bf16.mxu0 0
  %221 = vmatpush1.bf16.msra.mxu0 %v206
  %222 = vmatprep.subr.bf16.mxu0 0
  %223 = vmatpush1.bf16.msra.mxu0 %v207
  %224 = vmatprep.subr.bf16.mxu0 0
  %225 = vmatpush1.bf16.msra.mxu0 %v208
  %226 = vmatprep.subr.bf16.mxu0 0
  %227 = vmatpush1.bf16.msra.mxu0 %v209
  %228 = vmatprep.subr.bf16.mxu0 0
  %229 = vmatpush1.bf16.msra.mxu0 0
  %230 = vmatprep.subr.bf16.mxu0 0
  %231 = vmatpush1.bf16.msra.mxu0 0
  %232 = vmatprep.subr.bf16.mxu0 0
  %233 = vmatpush1.bf16.msra.mxu0 0
  %234 = vmatprep.subr.bf16.mxu0 0
  %235 = vmatpush1.bf16.msra.mxu0 0
  %236 = vmatprep.subr.bf16.mxu0 0
  %237 = vmatpush1.bf16.msra.mxu0 0
  %238 = vmatprep.subr.bf16.mxu0 0
  %239 = vmatpush1.bf16.msra.mxu0 0
  %240 = vmatprep.subr.bf16.mxu0 0
  %241 = vmatpush1.bf16.msra.mxu0 0
  %242 = vmatprep.subr.bf16.mxu0 0
  %243 = vmatpush1.bf16.msra.mxu0 0
  %244 = vmatprep.subr.bf16.mxu0 0
  %245 = vmatpush1.bf16.msra.mxu0 0
  %246 = vmatprep.subr.bf16.mxu0 0
  %247 = vmatpush1.bf16.msra.mxu0 0
  %248 = vmatprep.subr.bf16.mxu0 0
  %249 = vmatpush1.bf16.msra.mxu0 0
  %250 = vmatprep.subr.bf16.mxu0 0
  %251 = vmatpush1.bf16.msra.mxu0 0
  %252 = vmatprep.mubr.bf16.mxu0 0
  %253 = vmatmul.mubr.bf16.gmra.mrb[0].mxu0 %v215
  %v254 = vpop.f32.mrb[0].mxu0
  %v255 = vadd.f32 0.0, %v254
  %v256 = vpop.f32.mrb[0].mxu0
  %v257 = vpop.f32.mrb[0].mxu0
  %v258 = vadd.f32 0.0, %v257
  %v259 = vpop.f32.mrb[0].mxu0
  %260 = vmatprep.mubr.bf16.mxu0 0
  %261 = vmatmul.mubr.bf16.gmra.mrb[0].mxu0 %v218
  %v262 = vpop.f32.mrb[0].mxu0
  %v263 = vadd.f32 0.0, %v262
  %v264 = vpop.f32.mrb[0].mxu0
  %v265 = vpop.f32.mrb[0].mxu0
  %v266 = vadd.f32 0.0, %v265
  %v267 = vpop.f32.mrb[0].mxu0
  %268 = vdwg.mxu0
  %v269 = vld [vmem:[#allocation2] sm:$0xff]
  %v270 = vld [vmem:[#allocation2 + $0x8] sm:$0xff]
  %v271 = vld [vmem:[#allocation2 + $0x10] sm:$0xff]
  %v272 = vld [vmem:[#allocation2 + $0x18] sm:$0xff]
  %v273 = vadd.f32 %v269, %v255
  %v274 = vadd.f32 %v270, %v258
  %v275 = vadd.f32 %v271, %v263
  %v276 = vadd.f32 %v272, %v266
  %277 = vst [vmem:[#allocation2] sm:$0xff] %v273
  %278 = vst [vmem:[#allocation2 + $0x8] sm:$0xff] %v274
  %279 = vst [vmem:[#allocation2 + $0x10] sm:$0xff] %v275
  %280 = vst [vmem:[#allocation2 + $0x18] sm:$0xff] %v276
  %v281 = vld [vmem:[%s0] sm:$0xe]
  %v282 = vld [vmem:[%s0 + $0x4] sm:$0xf]
  %v283 = vld [vmem:[%s0 + $0x8] sm:$0x1]
  %v284 = vld [vmem:[%s0 + $0xc] sm:$0xe]
  %v285 = vld [vmem:[%s0 + $0x10] sm:$0xf]
  %v286 = vld [vmem:[%s0 + $0x14] sm:$0x1]
  %vm293 = vcmask 1042432
  %vm294 = vcmask 1046532
  %vm295 = vmor %vm293, %vm294
  %v296 = vrot.slane %v281, 5
  %v297 = vrot.slane %v296, 4
  %v298 = vrot.slane %v282, 5
  %v299 = vsel %vm295, %v297, %v298
  %v300 = vrot.slane %v298, 4
  %v301 = vrot.slane %v283, 5
  %v302 = vsel %vm295, %v300, %v301
  %v303 = vrot.slane %v284, 5
  %v304 = vrot.slane %v303, 4
  %v305 = vrot.slane %v285, 5
  %v306 = vsel %vm295, %v304, %v305
  %v307 = vrot.slane %v305, 4
  %v308 = vrot.slane %v286, 5
  %v309 = vsel %vm295, %v307, %v308
  %s310 = scalar_lea.vmem %s1, 64
  %v311 = vld [vmem:[%s310] sm:$0xf]
  %v312 = vld [vmem:[%s310 + $0x4] sm:$0xf]
  %v313 = vld [vmem:[%s310 + $0x8] sm:$0xf]
  %v314 = vld [vmem:[%s310 + $0xc] sm:$0xf]
  %v315 = vld [vmem:[%s310 + $0x10] sm:$0xf]
  %v316 = vld [vmem:[%s310 + $0x14] sm:$0xf]
  %v317 = vld [vmem:[%s310 + $0x18] sm:$0xf]
  %v318 = vld [vmem:[%s310 + $0x1c] sm:$0xf]
  %v319 = vunpack.c.l.b16 %v299
  %v320 = vunpack.c.l.b16 %v302
  %v321 = vunpack.c.l.b16 %v306
  %v322 = vunpack.c.l.b16 %v309
  %v323 = vpack.c.b16 %v320, %v319
  %v324 = vpack.c.b16 %v322, %v321
  %v333 = vunpack.c.l.b16 %v311
  %v334 = vunpack.c.l.b16 %v312
  %v335 = vunpack.c.l.b16 %v313
  %v336 = vunpack.c.l.b16 %v314
  %v337 = vunpack.c.l.b16 %v315
  %v338 = vunpack.c.l.b16 %v316
  %v339 = vunpack.c.l.b16 %v317
  %v340 = vunpack.c.l.b16 %v318
  %v341 = vpack.c.b16 %v334, %v333
  %v342 = vpack.c.b16 %v336, %v335
  %v343 = vpack.c.b16 %v338, %v337
  %v344 = vpack.c.b16 %v340, %v339
  %v350 = vsel %vm58, %v323, 0
  %v353 = vsel %vm58, %v324, 0
  %355 = vmatprep.subr.bf16.mxu0 0
  %356 = vmatpush1.bf16.msra.mxu0 %v341
  %357 = vmatprep.subr.bf16.mxu0 0
  %358 = vmatpush1.bf16.msra.mxu0 %v342
  %359 = vmatprep.subr.bf16.mxu0 0
  %360 = vmatpush1.bf16.msra.mxu0 %v343
  %361 = vmatprep.subr.bf16.mxu0 0
  %362 = vmatpush1.bf16.msra.mxu0 %v344
  %363 = vmatprep.subr.bf16.mxu0 0
  %364 = vmatpush1.bf16.msra.mxu0 0
  %365 = vmatprep.subr.bf16.mxu0 0
  %366 = vmatpush1.bf16.msra.mxu0 0
  %367 = vmatprep.subr.bf16.mxu0 0
  %368 = vmatpush1.bf16.msra.mxu0 0
  %369 = vmatprep.subr.bf16.mxu0 0
  %370 = vmatpush1.bf16.msra.mxu0 0
  %371 = vmatprep.subr.bf16.mxu0 0
  %372 = vmatpush1.bf16.msra.mxu0 0
  %373 = vmatprep.subr.bf16.mxu0 0
  %374 = vmatpush1.bf16.msra.mxu0 0
  %375 = vmatprep.subr.bf16.mxu0 0
  %376 = vmatpush1.bf16.msra.mxu0 0
  %377 = vmatprep.subr.bf16.mxu0 0
  %378 = vmatpush1.bf16.msra.mxu0 0
  %379 = vmatprep.subr.bf16.mxu0 0
  %380 = vmatpush1.bf16.msra.mxu0 0
  %381 = vmatprep.subr.bf16.mxu0 0
  %382 = vmatpush1.bf16.msra.mxu0 0
  %383 = vmatprep.subr.bf16.mxu0 0
  %384 = vmatpush1.bf16.msra.mxu0 0
  %385 = vmatprep.subr.bf16.mxu0 0
  %386 = vmatpush1.bf16.msra.mxu0 0
  %387 = vmatprep.mubr.bf16.mxu0 0
  %388 = vmatmul.mubr.bf16.gmra.mrb[0].mxu0 %v350
  %v389 = vpop.f32.mrb[0].mxu0
  %v390 = vadd.f32 0.0, %v389
  %v391 = vpop.f32.mrb[0].mxu0
  %v392 = vpop.f32.mrb[0].mxu0
  %v393 = vadd.f32 0.0, %v392
  %v394 = vpop.f32.mrb[0].mxu0
  %395 = vmatprep.mubr.bf16.mxu0 0
  %396 = vmatmul.mubr.bf16.gmra.mrb[0].mxu0 %v353
  %v397 = vpop.f32.mrb[0].mxu0
  %v398 = vadd.f32 0.0, %v397
  %v399 = vpop.f32.mrb[0].mxu0
  %v400 = vpop.f32.mrb[0].mxu0
  %v401 = vadd.f32 0.0, %v400
  %v402 = vpop.f32.mrb[0].mxu0
  %403 = vdwg.mxu0
  %v404 = vld [vmem:[#allocation2] sm:$0xff]
  %v405 = vld [vmem:[#allocation2 + $0x8] sm:$0xff]
  %v406 = vld [vmem:[#allocation2 + $0x10] sm:$0xff]
  %v407 = vld [vmem:[#allocation2 + $0x18] sm:$0xff]
  %v408 = vadd.f32 %v404, %v390
  %v409 = vadd.f32 %v405, %v393
  %v410 = vadd.f32 %v406, %v398
  %v411 = vadd.f32 %v407, %v401
  %412 = vst [vmem:[#allocation2] sm:$0xff] %v408
  %413 = vst [vmem:[#allocation2 + $0x8] sm:$0xff] %v409
  %414 = vst [vmem:[#allocation2 + $0x10] sm:$0xff] %v410
  %415 = vst [vmem:[#allocation2 + $0x18] sm:$0xff] %v411
  %v416 = vld [vmem:[#allocation2] sm:$0xff]
  %v417 = vld [vmem:[#allocation2 + $0x8] sm:$0xff]
  %v418 = vld [vmem:[#allocation2 + $0x10] sm:$0xff]
  %v419 = vld [vmem:[#allocation2 + $0x18] sm:$0xff]
  %v420 = vadd.f32 %v416, %v417
  %v421 = vadd.f32 %v420, %v418
  %v422 = vadd.f32 %v421, %v419
  %v423 = vrot.slane %v422, 4
  %v424 = vadd.f32 %v422, %v423
  %v425 = vrot.slane %v424, 2
  %v426 = vadd.f32 %v424, %v425
  %v427 = vrot.slane %v426, 1
  %v428 = vadd.f32 %v426, %v427
  %v429 = vmul.f32 %v416, %v416
  %v430 = vmul.f32 %v417, %v417
  %v431 = vmul.f32 %v418, %v418
  %v432 = vmul.f32 %v419, %v419
  %v433 = vadd.f32 %v429, %v430
  %v434 = vadd.f32 %v433, %v431
  %v435 = vadd.f32 %v434, %v432
  %v436 = vrot.slane %v435, 4
  %v437 = vadd.f32 %v435, %v436
  %v438 = vrot.slane %v437, 2
  %v439 = vadd.f32 %v437, %v438
  %v440 = vrot.slane %v439, 1
  %v441 = vadd.f32 %v439, %v440
  %vm442 = vcmask 1040384
  %v443 = vsel %vm442, %v428, %v441
  %444 = vst [vmem:[%s2] sm:$0x3] %v443
  // Predicated region
  $region10: #{norm_conv.2} parent=0 // pred_check
    _
  $region11: #{norm_conv.2} parent=0 // pred_check_branch
    %446 = sbr.rel (0) target = $region13
  $region12: #{norm_conv.2} parent=0 // pred_region
    _
  $region13: #{norm_conv.2} parent=0 // pred_fallthru
    _
  // Predicated region
  $region14: #{norm_conv.2} parent=0 // pred_check
    _
  $region15: #{norm_conv.2} parent=0 // pred_check_branch
    %448 = sbr.rel (0) target = $region17
  $region16: #{norm_conv.2} parent=0 // pred_region
    _
  $region17: #{norm_conv.2} parent=0 // pred_fallthru
    _

// kernel: norm_conv.3
$region0: #{norm_conv.3}
  #allocation0 [shape = 'u32[]', space=smem, size = 0x4, offset = 0x4, fixed_abs, tag = 'smem constant byte address 0x4 - core index']
  #allocation1 [shape = 'u32[144,128]{1,0:T(1,128)}', space=vmem, size = 0x12000, scoped, tag = 'internal scratch']
  #allocation2 [shape = 'f32[32,128]{1,0:T(8,128)}', space=vmem, size = 0x4000, scoped, tag = 'scratch operand']
  %s0 = inlined_call_operand.vmem [shape: bf16[2,18,64], index: 0, kind: input, shape index: {}]
  %s1 = inlined_call_operand.vmem [shape: bf16[3,64,128], index: 1, kind: input, shape index: {}]
  %s2 = inlined_call_operand.vmem [shape: f32[1,128], index: 2, kind: input, shape index: {}]
  %s3 = inlined_call_operand.vmem [shape: f32[1,128], index: 3, kind: input, shape index: {}]
  %s4 = inlined_call_operand.vmem [shape: f32[32,128], index: 4, kind: output, shape index: {}]
  %s5 = sld [smem:[#allocation0]]
  $region26: #{norm_conv.3} parent=0
    _
  %s7 = ssub.s32 1, %s5
  %s8 = scalar_select 0, %s7, %s5
  // Predicated region
  $region2: #{norm_conv.3} parent=0 // pred_check
    _
  $region3: #{norm_conv.3} parent=0 // pred_check_branch
    %10 = sbr.rel (0) target = $region5
  $region4: #{norm_conv.3} parent=0 // pred_region
    _
  $region5: #{norm_conv.3} parent=0 // pred_fallthru
    _
  // Predicated region
  $region6: #{norm_conv.3} parent=0 // pred_check
    _
  $region7: #{norm_conv.3} parent=0 // pred_check_branch
    %12 = sbr.rel (0) target = $region9
  $region8: #{norm_conv.3} parent=0 // pred_region
    _
  $region9: #{norm_conv.3} parent=0 // pred_fallthru
    _
  // Predicated region
  $region10: #{norm_conv.3} parent=0 // pred_check
    _
  $region11: #{norm_conv.3} parent=0 // pred_check_branch
    %14 = sbr.rel (0) target = $region13
  $region12: #{norm_conv.3} parent=0 // pred_region
    _
  $region13: #{norm_conv.3} parent=0 // pred_fallthru
    _
  // Predicated region
  $region14: #{norm_conv.3} parent=0 // pred_check
    _
  $region15: #{norm_conv.3} parent=0 // pred_check_branch
    %16 = sbr.rel (0) target = $region17
  $region16: #{norm_conv.3} parent=0 // pred_region
    _
  $region17: #{norm_conv.3} parent=0 // pred_fallthru
    _
  %v18 = vld [vmem:[%s0] sm:$0xf]
  %v19 = vld [vmem:[%s0 + $0x4] sm:$0xf]
  %v20 = vld [vmem:[%s0 + $0xc] sm:$0xf]
  %v21 = vld [vmem:[%s0 + $0x10] sm:$0xf]
  %v22 = vld [vmem:[%s1] sm:$0xf]
  %v23 = vld [vmem:[%s1 + $0x4] sm:$0xf]
  %v24 = vld [vmem:[%s1 + $0x8] sm:$0xf]
  %v25 = vld [vmem:[%s1 + $0xc] sm:$0xf]
  %v26 = vld [vmem:[%s1 + $0x10] sm:$0xf]
  %v27 = vld [vmem:[%s1 + $0x14] sm:$0xf]
  %v28 = vld [vmem:[%s1 + $0x18] sm:$0xf]
  %v29 = vld [vmem:[%s1 + $0x1c] sm:$0xf]
  %v34 = vunpack.c.l.b16 %v18
  %v35 = vunpack.c.l.b16 %v19
  %v36 = vunpack.c.l.b16 %v20
  %v37 = vunpack.c.l.b16 %v21
  %v38 = vpack.c.b16 %v35, %v34
  %v39 = vpack.c.b16 %v37, %v36
  %v48 = vunpack.c.l.b16 %v22
  %v49 = vunpack.c.l.b16 %v23
  %v50 = vunpack.c.l.b16 %v24
  %v51 = vunpack.c.l.b16 %v25
  %v52 = vunpack.c.l.b16 %v26
  %v53 = vunpack.c.l.b16 %v27
  %v54 = vunpack.c.l.b16 %v28
  %v55 = vunpack.c.l.b16 %v29
  %v56 = vpack.c.b16 %v49, %v48
  %v57 = vpack.c.b16 %v51, %v50
  %v58 = vpack.c.b16 %v53, %v52
  %v59 = vpack.c.b16 %v55, %v54
  %vm64 = vcmask 523264
  %v66 = vsel %vm64, %v38, 0
  %v69 = vsel %vm64, %v39, 0
  %71 = vmatprep.subr.bf16.mxu0 0
  %72 = vmatpush1.bf16.msra.mxu0 %v56
  %73 = vmatprep.subr.bf16.mxu0 0
  %74 = vmatpush1.bf16.msra.mxu0 %v57
  %75 = vmatprep.subr.bf16.mxu0 0
  %76 = vmatpush1.bf16.msra.mxu0 %v58
  %77 = vmatprep.subr.bf16.mxu0 0
  %78 = vmatpush1.bf16.msra.mxu0 %v59
  %79 = vmatprep.subr.bf16.mxu0 0
  %80 = vmatpush1.bf16.msra.mxu0 0
  %81 = vmatprep.subr.bf16.mxu0 0
  %82 = vmatpush1.bf16.msra.mxu0 0
  %83 = vmatprep.subr.bf16.mxu0 0
  %84 = vmatpush1.bf16.msra.mxu0 0
  %85 = vmatprep.subr.bf16.mxu0 0
  %86 = vmatpush1.bf16.msra.mxu0 0
  %87 = vmatprep.subr.bf16.mxu0 0
  %88 = vmatpush1.bf16.msra.mxu0 0
  %89 = vmatprep.subr.bf16.mxu0 0
  %90 = vmatpush1.bf16.msra.mxu0 0
  %91 = vmatprep.subr.bf16.mxu0 0
  %92 = vmatpush1.bf16.msra.mxu0 0
  %93 = vmatprep.subr.bf16.mxu0 0
  %94 = vmatpush1.bf16.msra.mxu0 0
  %95 = vmatprep.subr.bf16.mxu0 0
  %96 = vmatpush1.bf16.msra.mxu0 0
  %97 = vmatprep.subr.bf16.mxu0 0
  %98 = vmatpush1.bf16.msra.mxu0 0
  %99 = vmatprep.subr.bf16.mxu0 0
  %100 = vmatpush1.bf16.msra.mxu0 0
  %101 = vmatprep.subr.bf16.mxu0 0
  %102 = vmatpush1.bf16.msra.mxu0 0
  %103 = vmatprep.mubr.bf16.mxu0 0
  %104 = vmatmul.mubr.bf16.gmra.mrb[0].mxu0 %v66
  %v105 = vpop.f32.mrb[0].mxu0
  %v106 = vadd.f32 0.0, %v105
  %v107 = vpop.f32.mrb[0].mxu0
  %v108 = vpop.f32.mrb[0].mxu0
  %v109 = vadd.f32 0.0, %v108
  %v110 = vpop.f32.mrb[0].mxu0
  %111 = vmatprep.mubr.bf16.mxu0 0
  %112 = vmatmul.mubr.bf16.gmra.mrb[0].mxu0 %v69
  %v113 = vpop.f32.mrb[0].mxu0
  %v114 = vadd.f32 0.0, %v113
  %v115 = vpop.f32.mrb[0].mxu0
  %v116 = vpop.f32.mrb[0].mxu0
  %v117 = vadd.f32 0.0, %v116
  %v118 = vpop.f32.mrb[0].mxu0
  %119 = vdwg.mxu0
  %120 = vst [vmem:[#allocation2] sm:$0xff] %v106
  %121 = vst [vmem:[#allocation2 + $0x8] sm:$0xff] %v109
  %122 = vst [vmem:[#allocation2 + $0x10] sm:$0xff] %v114
  %123 = vst [vmem:[#allocation2 + $0x18] sm:$0xff] %v117
  %v124 = vld [vmem:[%s0] sm:$0xf]
  %v125 = vld [vmem:[%s0 + $0x4] sm:$0xf]
  %v126 = vld [vmem:[%s0 + $0x8] sm:$0x1]
  %v127 = vld [vmem:[%s0 + $0xc] sm:$0xf]
  %v128 = vld [vmem:[%s0 + $0x10] sm:$0xf]
  %v129 = vld [vmem:[%s0 + $0x14] sm:$0x1]
  %vm130 = vsmask.f32 3328
  %vm131 = vsmask.f32 7440
  %vm132 = vmor %vm130, %vm131
  %v134 = vshrl.u32 %v124, 16
  %v136 = vrot.slane %v134, 4
  %v137 = vshll.u32 %v124, 16
  %v139 = vrot.slane %v137, 5
  %v140 = vor.u32 %v136, %v139
  %v141 = vrot.slane %v140, 4
  %v143 = vshll.u32 %v125, 16
  %v145 = vrot.slane %v143, 5
  %v146 = vsel %vm132, %v141, %v145
  %v147 = vshrl.u32 %v125, 16
  %v149 = vrot.slane %v147, 4
  %v150 = vor.u32 %v149, %v145
  %v151 = vrot.slane %v150, 4
  %v153 = vshll.u32 %v126, 16
  %v155 = vrot.slane %v153, 5
  %v156 = vsel %vm132, %v151, %v155
  %v158 = vshrl.u32 %v127, 16
  %v160 = vrot.slane %v158, 4
  %v161 = vshll.u32 %v127, 16
  %v163 = vrot.slane %v161, 5
  %v164 = vor.u32 %v160, %v163
  %v165 = vrot.slane %v164, 4
  %v167 = vshll.u32 %v128, 16
  %v169 = vrot.slane %v167, 5
  %v170 = vsel %vm132, %v165, %v169
  %v171 = vshrl.u32 %v128, 16
  %v173 = vrot.slane %v171, 4
  %v174 = vor.u32 %v173, %v169
  %v175 = vrot.slane %v174, 4
  %v177 = vshll.u32 %v129, 16
  %v179 = vrot.slane %v177, 5
  %v180 = vsel %vm132, %v175, %v179
  %s181 = scalar_lea.vmem %s1, 32
  %v182 = vld [vmem:[%s181] sm:$0xf]
  %v183 = vld [vmem:[%s181 + $0x4] sm:$0xf]
  %v184 = vld [vmem:[%s181 + $0x8] sm:$0xf]
  %v185 = vld [vmem:[%s181 + $0xc] sm:$0xf]
  %v186 = vld [vmem:[%s181 + $0x10] sm:$0xf]
  %v187 = vld [vmem:[%s181 + $0x14] sm:$0xf]
  %v188 = vld [vmem:[%s181 + $0x18] sm:$0xf]
  %v189 = vld [vmem:[%s181 + $0x1c] sm:$0xf]
  %v190 = vunpack.c.l.b16 %v146
  %v191 = vunpack.c.l.b16 %v156
  %v192 = vunpack.c.l.b16 %v170
  %v193 = vunpack.c.l.b16 %v180
  %v194 = vpack.c.b16 %v191, %v190
  %v195 = vpack.c.b16 %v193, %v192
  %v204 = vunpack.c.l.b16 %v182
  %v205 = vunpack.c.l.b16 %v183
  %v206 = vunpack.c.l.b16 %v184
  %v207 = vunpack.c.l.b16 %v185
  %v208 = vunpack.c.l.b16 %v186
  %v209 = vunpack.c.l.b16 %v187
  %v210 = vunpack.c.l.b16 %v188
  %v211 = vunpack.c.l.b16 %v189
  %v212 = vpack.c.b16 %v205, %v204
  %v213 = vpack.c.b16 %v207, %v206
  %v214 = vpack.c.b16 %v209, %v208
  %v215 = vpack.c.b16 %v211, %v210
  %v221 = vsel %vm64, %v194, 0
  %v224 = vsel %vm64, %v195, 0
  %226 = vmatprep.subr.bf16.mxu0 0
  %227 = vmatpush1.bf16.msra.mxu0 %v212
  %228 = vmatprep.subr.bf16.mxu0 0
  %229 = vmatpush1.bf16.msra.mxu0 %v213
  %230 = vmatprep.subr.bf16.mxu0 0
  %231 = vmatpush1.bf16.msra.mxu0 %v214
  %232 = vmatprep.subr.bf16.mxu0 0
  %233 = vmatpush1.bf16.msra.mxu0 %v215
  %234 = vmatprep.subr.bf16.mxu0 0
  %235 = vmatpush1.bf16.msra.mxu0 0
  %236 = vmatprep.subr.bf16.mxu0 0
  %237 = vmatpush1.bf16.msra.mxu0 0
  %238 = vmatprep.subr.bf16.mxu0 0
  %239 = vmatpush1.bf16.msra.mxu0 0
  %240 = vmatprep.subr.bf16.mxu0 0
  %241 = vmatpush1.bf16.msra.mxu0 0
  %242 = vmatprep.subr.bf16.mxu0 0
  %243 = vmatpush1.bf16.msra.mxu0 0
  %244 = vmatprep.subr.bf16.mxu0 0
  %245 = vmatpush1.bf16.msra.mxu0 0
  %246 = vmatprep.subr.bf16.mxu0 0
  %247 = vmatpush1.bf16.msra.mxu0 0
  %248 = vmatprep.subr.bf16.mxu0 0
  %249 = vmatpush1.bf16.msra.mxu0 0
  %250 = vmatprep.subr.bf16.mxu0 0
  %251 = vmatpush1.bf16.msra.mxu0 0
  %252 = vmatprep.subr.bf16.mxu0 0
  %253 = vmatpush1.bf16.msra.mxu0 0
  %254 = vmatprep.subr.bf16.mxu0 0
  %255 = vmatpush1.bf16.msra.mxu0 0
  %256 = vmatprep.subr.bf16.mxu0 0
  %257 = vmatpush1.bf16.msra.mxu0 0
  %258 = vmatprep.mubr.bf16.mxu0 0
  %259 = vmatmul.mubr.bf16.gmra.mrb[0].mxu0 %v221
  %v260 = vpop.f32.mrb[0].mxu0
  %v261 = vadd.f32 0.0, %v260
  %v262 = vpop.f32.mrb[0].mxu0
  %v263 = vpop.f32.mrb[0].mxu0
  %v264 = vadd.f32 0.0, %v263
  %v265 = vpop.f32.mrb[0].mxu0
  %266 = vmatprep.mubr.bf16.mxu0 0
  %267 = vmatmul.mubr.bf16.gmra.mrb[0].mxu0 %v224
  %v268 = vpop.f32.mrb[0].mxu0
  %v269 = vadd.f32 0.0, %v268
  %v270 = vpop.f32.mrb[0].mxu0
  %v271 = vpop.f32.mrb[0].mxu0
  %v272 = vadd.f32 0.0, %v271
  %v273 = vpop.f32.mrb[0].mxu0
  %274 = vdwg.mxu0
  %v275 = vld [vmem:[#allocation2] sm:$0xff]
  %v276 = vld [vmem:[#allocation2 + $0x8] sm:$0xff]
  %v277 = vld [vmem:[#allocation2 + $0x10] sm:$0xff]
  %v278 = vld [vmem:[#allocation2 + $0x18] sm:$0xff]
  %v279 = vadd.f32 %v275, %v261
  %v280 = vadd.f32 %v276, %v264
  %v281 = vadd.f32 %v277, %v269
  %v282 = vadd.f32 %v278, %v272
  %283 = vst [vmem:[#allocation2] sm:$0xff] %v279
  %284 = vst [vmem:[#allocation2 + $0x8] sm:$0xff] %v280
  %285 = vst [vmem:[#allocation2 + $0x10] sm:$0xff] %v281
  %286 = vst [vmem:[#allocation2 + $0x18] sm:$0xff] %v282
  %v287 = vld [vmem:[%s0] sm:$0xe]
  %v288 = vld [vmem:[%s0 + $0x4] sm:$0xf]
  %v289 = vld [vmem:[%s0 + $0x8] sm:$0x1]
  %v290 = vld [vmem:[%s0 + $0xc] sm:$0xe]
  %v291 = vld [vmem:[%s0 + $0x10] sm:$0xf]
  %v292 = vld [vmem:[%s0 + $0x14] sm:$0x1]
  %vm299 = vcmask 1042432
  %vm300 = vcmask 1046532
  %vm301 = vmor %vm299, %vm300
  %v302 = vrot.slane %v287, 5
  %v303 = vrot.slane %v302, 4
  %v304 = vrot.slane %v288, 5
  %v305 = vsel %vm301, %v303, %v304
  %v306 = vrot.slane %v304, 4
  %v307 = vrot.slane %v289, 5
  %v308 = vsel %vm301, %v306, %v307
  %v309 = vrot.slane %v290, 5
  %v310 = vrot.slane %v309, 4
  %v311 = vrot.slane %v291, 5
  %v312 = vsel %vm301, %v310, %v311
  %v313 = vrot.slane %v311, 4
  %v314 = vrot.slane %v292, 5
  %v315 = vsel %vm301, %v313, %v314
  %s316 = scalar_lea.vmem %s1, 64
  %v317 = vld [vmem:[%s316] sm:$0xf]
  %v318 = vld [vmem:[%s316 + $0x4] sm:$0xf]
  %v319 = vld [vmem:[%s316 + $0x8] sm:$0xf]
  %v320 = vld [vmem:[%s316 + $0xc] sm:$0xf]
  %v321 = vld [vmem:[%s316 + $0x10] sm:$0xf]
  %v322 = vld [vmem:[%s316 + $0x14] sm:$0xf]
  %v323 = vld [vmem:[%s316 + $0x18] sm:$0xf]
  %v324 = vld [vmem:[%s316 + $0x1c] sm:$0xf]
  %v325 = vunpack.c.l.b16 %v305
  %v326 = vunpack.c.l.b16 %v308
  %v327 = vunpack.c.l.b16 %v312
  %v328 = vunpack.c.l.b16 %v315
  %v329 = vpack.c.b16 %v326, %v325
  %v330 = vpack.c.b16 %v328, %v327
  %v339 = vunpack.c.l.b16 %v317
  %v340 = vunpack.c.l.b16 %v318
  %v341 = vunpack.c.l.b16 %v319
  %v342 = vunpack.c.l.b16 %v320
  %v343 = vunpack.c.l.b16 %v321
  %v344 = vunpack.c.l.b16 %v322
  %v345 = vunpack.c.l.b16 %v323
  %v346 = vunpack.c.l.b16 %v324
  %v347 = vpack.c.b16 %v340, %v339
  %v348 = vpack.c.b16 %v342, %v341
  %v349 = vpack.c.b16 %v344, %v343
  %v350 = vpack.c.b16 %v346, %v345
  %v356 = vsel %vm64, %v329, 0
  %v359 = vsel %vm64, %v330, 0
  %361 = vmatprep.subr.bf16.mxu0 0
  %362 = vmatpush1.bf16.msra.mxu0 %v347
  %363 = vmatprep.subr.bf16.mxu0 0
  %364 = vmatpush1.bf16.msra.mxu0 %v348
  %365 = vmatprep.subr.bf16.mxu0 0
  %366 = vmatpush1.bf16.msra.mxu0 %v349
  %367 = vmatprep.subr.bf16.mxu0 0
  %368 = vmatpush1.bf16.msra.mxu0 %v350
  %369 = vmatprep.subr.bf16.mxu0 0
  %370 = vmatpush1.bf16.msra.mxu0 0
  %371 = vmatprep.subr.bf16.mxu0 0
  %372 = vmatpush1.bf16.msra.mxu0 0
  %373 = vmatprep.subr.bf16.mxu0 0
  %374 = vmatpush1.bf16.msra.mxu0 0
  %375 = vmatprep.subr.bf16.mxu0 0
  %376 = vmatpush1.bf16.msra.mxu0 0
  %377 = vmatprep.subr.bf16.mxu0 0
  %378 = vmatpush1.bf16.msra.mxu0 0
  %379 = vmatprep.subr.bf16.mxu0 0
  %380 = vmatpush1.bf16.msra.mxu0 0
  %381 = vmatprep.subr.bf16.mxu0 0
  %382 = vmatpush1.bf16.msra.mxu0 0
  %383 = vmatprep.subr.bf16.mxu0 0
  %384 = vmatpush1.bf16.msra.mxu0 0
  %385 = vmatprep.subr.bf16.mxu0 0
  %386 = vmatpush1.bf16.msra.mxu0 0
  %387 = vmatprep.subr.bf16.mxu0 0
  %388 = vmatpush1.bf16.msra.mxu0 0
  %389 = vmatprep.subr.bf16.mxu0 0
  %390 = vmatpush1.bf16.msra.mxu0 0
  %391 = vmatprep.subr.bf16.mxu0 0
  %392 = vmatpush1.bf16.msra.mxu0 0
  %393 = vmatprep.mubr.bf16.mxu0 0
  %394 = vmatmul.mubr.bf16.gmra.mrb[0].mxu0 %v356
  %v395 = vpop.f32.mrb[0].mxu0
  %v396 = vadd.f32 0.0, %v395
  %v397 = vpop.f32.mrb[0].mxu0
  %v398 = vpop.f32.mrb[0].mxu0
  %v399 = vadd.f32 0.0, %v398
  %v400 = vpop.f32.mrb[0].mxu0
  %401 = vmatprep.mubr.bf16.mxu0 0
  %402 = vmatmul.mubr.bf16.gmra.mrb[0].mxu0 %v359
  %v403 = vpop.f32.mrb[0].mxu0
  %v404 = vadd.f32 0.0, %v403
  %v405 = vpop.f32.mrb[0].mxu0
  %v406 = vpop.f32.mrb[0].mxu0
  %v407 = vadd.f32 0.0, %v406
  %v408 = vpop.f32.mrb[0].mxu0
  %409 = vdwg.mxu0
  %v410 = vld [vmem:[#allocation2] sm:$0xff]
  %v411 = vld [vmem:[#allocation2 + $0x8] sm:$0xff]
  %v412 = vld [vmem:[#allocation2 + $0x10] sm:$0xff]
  %v413 = vld [vmem:[#allocation2 + $0x18] sm:$0xff]
  %v414 = vadd.f32 %v410, %v396
  %v415 = vadd.f32 %v411, %v399
  %v416 = vadd.f32 %v412, %v404
  %v417 = vadd.f32 %v413, %v407
  %418 = vst [vmem:[#allocation2] sm:$0xff] %v414
  %419 = vst [vmem:[#allocation2 + $0x8] sm:$0xff] %v415
  %420 = vst [vmem:[#allocation2 + $0x10] sm:$0xff] %v416
  %421 = vst [vmem:[#allocation2 + $0x18] sm:$0xff] %v417
  %v422 = vld [vmem:[#allocation2] sm:$0xff]
  %v423 = vld [vmem:[#allocation2 + $0x8] sm:$0xff]
  %v424 = vld [vmem:[#allocation2 + $0x10] sm:$0xff]
  %v425 = vld [vmem:[#allocation2 + $0x18] sm:$0xff]
  %v426 = vld [vmem:[%s2] sm:$0x1]
  %v428 = vlaneseq
  %v429 = vshrl.u32 %v428, 7
  %v430 = vsub.s32 0, %v429
  %v431 = vrot.slane %v426, %v430
  %v433 = vmul.f32 %v422, %v431
  %v434 = vmul.f32 %v423, %v431
  %v435 = vmul.f32 %v424, %v431
  %v436 = vmul.f32 %v425, %v431
  %v437 = vld [vmem:[%s3] sm:$0x1]
  %v439 = vlaneseq
  %v440 = vshrl.u32 %v439, 7
  %v441 = vsub.s32 0, %v440
  %v442 = vrot.slane %v437, %v441
  %v444 = vadd.f32 %v433, %v442
  %v445 = vadd.f32 %v434, %v442
  %v446 = vadd.f32 %v435, %v442
  %v447 = vadd.f32 %v436, %v442
  %v448 = vmax.f32 %v444, 0.0
  %v449 = vmax.f32 %v445, 0.0
  %v450 = vmax.f32 %v446, 0.0
  %v451 = vmax.f32 %v447, 0.0
  %452 = vst [vmem:[%s4] sm:$0xff] %v448
  %453 = vst [vmem:[%s4 + $0x8] sm:$0xff] %v449
  %454 = vst [vmem:[%s4 + $0x10] sm:$0xff] %v450
  %455 = vst [vmem:[%s4 + $0x18] sm:$0xff] %v451
  // Predicated region
  $region18: #{norm_conv.3} parent=0 // pred_check
    _
  $region19: #{norm_conv.3} parent=0 // pred_check_branch
    %457 = sbr.rel (0) target = $region21
  $region20: #{norm_conv.3} parent=0 // pred_region
    _
  $region21: #{norm_conv.3} parent=0 // pred_fallthru
    _
  // Predicated region
  $region22: #{norm_conv.3} parent=0 // pred_check
    _
  $region23: #{norm_conv.3} parent=0 // pred_check_branch
    %459 = sbr.rel (0) target = $region25
  $region24: #{norm_conv.3} parent=0 // pred_region
    _
  $region25: #{norm_conv.3} parent=0 // pred_fallthru
    _

</llo_original>
